<compile_context>
chip_gen: v7x
topology: tpu7x:2x2x1
jax: 0.10.0
libtpu: 0.0.40
codegen_flags: <defaults>
</compile_context>

<pallas_src>
import functools

import jax
import jax.numpy as jnp
from jax import lax
from jax.experimental import pallas as pl
from jax.experimental.pallas import tpu as pltpu


def chexpert_labels():
    return [
        "No Finding", "Enlarged Cardiomediastinum", "Cardiomegaly",
        "Lung Opacity", "Lung Lesion", "Edema", "Consolidation", "Pneumonia",
        "Atelectasis", "Pneumothorax", "Pleural Effusion", "Pleural Other",
        "Fracture", "Support Devices",
    ]


NUM_TASKS = len(chexpert_labels())  # 14
N_PAD = 128                         # lane-dense output width
_VMEM_LIMIT = 32 * 1024 * 1024      # explicit scoped-VMEM limit (safe on v5e/v6e/v7x)
_VMEM_BUDGET = 24 * 1024 * 1024     # working-set budget used to size tile_b


# ----------------------------- Pallas kernels -----------------------------

def _head_kernel_no_labels(x_ref, w_ref, b_ref, pred_ref, *, return_probs):
    # bf16 cast happens in-kernel (x arrives as f32 straight from HBM).
    x = x_ref[...].astype(jnp.bfloat16)
    logits = jnp.dot(x, w_ref[...], preferred_element_type=jnp.float32)
    logits = logits + b_ref[...]
    preds = jax.nn.sigmoid(logits) if return_probs else logits
    pred_ref[...] = preds.astype(pred_ref.dtype)


def _head_kernel_with_labels(x_ref, w_ref, b_ref, y_ref, pred_ref, loss_ref,
                             *, return_probs, batch, n_tasks, tile_b):
    i = pl.program_id(0)

    x = x_ref[...].astype(jnp.bfloat16)
    logits = jnp.dot(x, w_ref[...], preferred_element_type=jnp.float32)
    logits = logits + b_ref[...]

    # Share e = exp(-|z|) between sigmoid and the BCE softplus term.
    if return_probs:
        e = jnp.exp(-jnp.abs(logits))
        inv = 1.0 / (1.0 + e)
        preds = jnp.where(logits >= 0.0, inv, e * inv)     # == sigmoid(z)
        e14 = e[:, :n_tasks]
    else:
        preds = logits
        e14 = jnp.exp(-jnp.abs(logits[:, :n_tasks]))
    pred_ref[...] = preds.astype(pred_ref.dtype)

    # binary_cross_entropy_with_logits (no pos_weight), per-tile partial sum:
    #   max(z,0) - z*y + log1p(exp(-|z|))
    # Only the real 14 columns participate; OOB rows of the last partial tile
    # are masked (their contents are undefined but finite-or-NaN-safe under
    # jnp.where, which is a select).
    z14 = logits[:, :n_tasks]
    y = y_ref[...].astype(jnp.float32)
    per_elem = (jnp.maximum(z14, 0.0) - z14 * y + jnp.log1p(e14))
    rows = i * tile_b + lax.broadcasted_iota(jnp.int32, per_elem.shape, 0)
    per_elem = jnp.where(rows < batch, per_elem, 0.0)

    # One SMEM scalar per grid step (per-tile partial); the final sum and the
    # 1/(B*N) scale happen in the wrapper, so the grid axis stays "parallel".
    loss_ref[0, 0] = jnp.sum(per_elem)


# ------------------------------- wrapper -----------------------------------

def _default_tile_b(B, d_y, has_labels):
    # Double-buffered working set per row: x (f32) + preds (f32) [+ labels].
    per_row = 2 * d_y * 4 + 2 * N_PAD * 4
    if has_labels:
        per_row += 2 * NUM_TASKS * 4
    fixed = 2 * (d_y * N_PAD * 2 + N_PAD * 4)   # w (bf16) + bias, double-buffered
    cap = max(64, (_VMEM_BUDGET - fixed) // per_row)
    cap = int(min(1024, cap))
    if B <= cap:
        return B
    return (cap // 8) * 8


@functools.partial(jax.jit, static_argnames=("return_probs", "tile_b"))
def classification_head_forward(yg, w_t, b, labels=None, return_probs=True,
                                tile_b=None):
    """yg: (B, d_y) float32; w_t: (d_y, N) float32; b: (N,) float32.

    Returns probs (B, N) if labels is None, else (probs, labels, loss).
    """
    # TODO(synk): training-mode dropout (p=0.2) omitted; eval mode => identity.
    # TODO(synk): pos_weight variant ('chexpert_binary_weighted') not implemented.
    B, d_y = yg.shape
    N = w_t.shape[1]

    if tile_b is None:
        tile_b = _default_tile_b(B, d_y, labels is not None)
    num_tiles = pl.cdiv(B, tile_b)

    # Lane-dense (128-wide) classifier columns; weights fed to the MXU as bf16.
    w_pad = jnp.zeros((d_y, N_PAD), jnp.bfloat16).at[:, :N].set(
        w_t.astype(jnp.bfloat16))
    b_pad = jnp.zeros((1, N_PAD), jnp.float32).at[:, :N].set(
        b.reshape(1, N).astype(jnp.float32))

    x_spec = pl.BlockSpec((tile_b, d_y), lambda i: (i, 0))
    w_spec = pl.BlockSpec((d_y, N_PAD), lambda i: (0, 0))
    b_spec = pl.BlockSpec((1, N_PAD), lambda i: (0, 0))
    pred_spec = pl.BlockSpec((tile_b, N_PAD), lambda i: (i, 0))

    if labels is None:
        kernel = functools.partial(_head_kernel_no_labels,
                                   return_probs=return_probs)
        cost = pl.CostEstimate(
            flops=2 * B * d_y * N_PAD,
            transcendentals=(B * N_PAD) if return_probs else 0,
            bytes_accessed=B * d_y * 4 + d_y * N_PAD * 2 + N_PAD * 4
                           + B * N_PAD * 4)
        preds_pad = pl.pallas_call(
            kernel,
            grid=(num_tiles,),
            out_shape=jax.ShapeDtypeStruct((B, N_PAD), jnp.float32),
            in_specs=[x_spec, w_spec, b_spec],
            out_specs=pred_spec,
            compiler_params=pltpu.CompilerParams(
                dimension_semantics=("parallel",),
                vmem_limit_bytes=_VMEM_LIMIT),
            cost_estimate=cost,
        )(yg, w_pad, b_pad)
        # Only the first N columns are valid; keep this slice inside the same
        # jit as the consumer so it fuses instead of becoming its own HBM pass.
        return preds_pad[:, :N]

    if isinstance(labels, dict):
        labels = jnp.stack([labels[t] for t in chexpert_labels()], axis=-1)
    labels_f32 = labels.astype(jnp.float32)

    # (B, 14) labels go in directly: full-extent last dim is a legal BlockSpec.
    y_spec = pl.BlockSpec((tile_b, N), lambda i: (i, 0))
    loss_spec = pl.BlockSpec((1, 1), lambda i: (i, 0),
                             memory_space=pltpu.MemorySpace.SMEM)

    kernel = functools.partial(_head_kernel_with_labels,
                               return_probs=return_probs,
                               batch=B, n_tasks=N, tile_b=tile_b)
    cost = pl.CostEstimate(
        flops=2 * B * d_y * N_PAD + 6 * B * N,
        transcendentals=((B * N_PAD) if return_probs else 0) + 2 * B * N,
        bytes_accessed=B * d_y * 4 + d_y * N_PAD * 2 + N_PAD * 4
                       + B * N * 4 + B * N_PAD * 4 + num_tiles * 4)
    preds_pad, loss_parts = pl.pallas_call(
        kernel,
        grid=(num_tiles,),
        out_shape=(jax.ShapeDtypeStruct((B, N_PAD), jnp.float32),
                   jax.ShapeDtypeStruct((num_tiles, 1), jnp.float32)),
        in_specs=[x_spec, w_spec, b_spec, y_spec],
        out_specs=(pred_spec, loss_spec),
        compiler_params=pltpu.CompilerParams(
            dimension_semantics=("parallel",),
            vmem_limit_bytes=_VMEM_LIMIT),
        cost_estimate=cost,
    )(yg, w_pad, b_pad, labels_f32)

    loss = jnp.sum(loss_parts) * (1.0 / float(B * N))
    return preds_pad[:, :N], labels_f32, loss


# ---------------------------- pure-JAX reference ----------------------------

def _reference(yg, w_t, b, labels=None, return_probs=True):
    # same numerics as the kernel: bf16 matmul, f32 accumulation + epilogue
    logits = jnp.dot(yg.astype(jnp.bfloat16), w_t.astype(jnp.bfloat16),
                     preferred_element_type=jnp.float32) + b.astype(jnp.float32)
    preds = jax.nn.sigmoid(logits) if return_probs else logits
    if labels is None:
        return preds
    y = labels.astype(jnp.float32)
    per = (jnp.maximum(logits, 0.0) - logits * y
           + jnp.log1p(jnp.exp(-jnp.abs(logits))))
    return preds, y, jnp.mean(per)


# --------------------------------- main -------------------------------------

if __name__ == "__main__":
    N = NUM_TASKS  # 14
    key = jax.random.PRNGKey(0)
    k_x, k_w, k_b, k_y, k_x2, k_y2 = jax.random.split(key, 6)

    # deterministic nn.Linear(d_y, N)-style init: U(-1/sqrt(d_y), 1/sqrt(d_y))
    B, d_y = 2, 32
    bound = 1.0 / jnp.sqrt(jnp.float32(d_y))
    w = jax.random.uniform(k_w, (N, d_y), minval=-bound, maxval=bound,
                           dtype=jnp.float32)   # PyTorch layout (out, in)
    b = jax.random.uniform(k_b, (N,), minval=-bound, maxval=bound,
                           dtype=jnp.float32)
    w_t = w.T  # (d_y, N) for the kernel

    # --- case 1: small batch (single tile), both label / no-label paths ---
    yg = jax.random.normal(k_x, (B, d_y), dtype=jnp.float32)
    labels = (jax.random.uniform(k_y, (B, N)) > 0.5).astype(jnp.float32)

    probs = classification_head_forward(yg, w_t, b, labels=None,
                                        return_probs=True)
    probs = jax.block_until_ready(probs)

    probs2, labels_out, loss = classification_head_forward(
        yg, w_t, b, labels=labels, return_probs=True)
    loss = jax.block_until_ready(loss)

    ref_probs = _reference(yg, w_t, b)
    _, _, ref_loss = _reference(yg, w_t, b, labels=labels)
    assert jnp.allclose(probs, ref_probs, atol=2e-5, rtol=1e-4)
    assert jnp.allclose(probs2, ref_probs, atol=2e-5, rtol=1e-4)
    assert jnp.allclose(loss, ref_loss, atol=2e-5, rtol=1e-4)
    assert jnp.array_equal(labels_out, labels)

    # --- case 2: multi-tile batch (exercises grid, padded last tile mask) ---
    B2 = 40
    yg2 = jax.random.normal(k_x2, (B2, d_y), dtype=jnp.float32)
    labels2 = (jax.random.uniform(k_y2, (B2, N)) > 0.5).astype(jnp.float32)

    probs3, _, loss3 = classification_head_forward(
        yg2, w_t, b, labels=labels2, return_probs=True, tile_b=16)
    loss3 = jax.block_until_ready(loss3)

    ref_probs3, _, ref_loss3 = _reference(yg2, w_t, b, labels=labels2)
    assert jnp.allclose(probs3, ref_probs3, atol=2e-5, rtol=1e-4)
    assert jnp.allclose(loss3, ref_loss3, atol=2e-5, rtol=1e-4)

    # --- case 3: no-label multi-tile path (parallel grid, logits output) ---
    logits3 = classification_head_forward(yg2, w_t, b, labels=None,
                                          return_probs=False, tile_b=16)
    logits3 = jax.block_until_ready(logits3)
    ref_logits3 = _reference(yg2, w_t, b, return_probs=False)
    assert jnp.allclose(logits3, ref_logits3, atol=2e-5, rtol=1e-4)

    print("KERNEL_OK")
</pallas_src>

<mosaic_0001>
module attributes {stable_mosaic.version = 11 : i64} {
  func.func @_head_kernel_no_labels(%arg0: i32, %arg1: memref<2x32xf32, #tpu.memory_space<vmem>>, %arg2: memref<32x128xbf16, #tpu.memory_space<vmem>>, %arg3: memref<1x128xf32, #tpu.memory_space<vmem>>, %arg4: memref<2x128xf32, #tpu.memory_space<vmem>>) attributes {dimension_semantics = [#tpu.dimension_semantics<parallel>], iteration_bounds = array<i64: 1>, scalar_prefetch = 0 : i64, scratch_operands = 0 : i64, tpu.core_type = #tpu.core_type<tc>, window_params = [{transform_indices = @transform_0, window_bounds = array<i64: 2, 32>}, {pipeline_mode = #tpu.pipeline_mode<synchronous>, transform_indices = @transform_1, window_bounds = array<i64: 32, 128>}, {pipeline_mode = #tpu.pipeline_mode<synchronous>, transform_indices = @transform_2, window_bounds = array<i64: 1, 128>}, {transform_indices = @transform_3, window_bounds = array<i64: 2, 128>}]} {
    %c0 = arith.constant 0 : index
    %c0_0 = arith.constant 0 : index
    %0 = vector.load %arg1[%c0, %c0_0] : memref<2x32xf32, #tpu.memory_space<vmem>>, vector<2x32xf32>
    %1 = arith.truncf %0 : vector<2x32xf32> to vector<2x32xbf16>
    %c0_1 = arith.constant 0 : index
    %c0_2 = arith.constant 0 : index
    %2 = vector.load %arg2[%c0_1, %c0_2] : memref<32x128xbf16, #tpu.memory_space<vmem>>, vector<32x128xbf16>
    %cst = arith.constant dense<0.000000e+00> : vector<2x128xf32>
    %3 = tpu.matmul %1, %2, %cst {dimension_numbers = #tpu.dot_dimension_numbers<[1], [0], [0], [1], [0, 0, 1, 1], [], []>} : vector<2x32xbf16>, vector<32x128xbf16>, vector<2x128xf32> -> vector<2x128xf32>
    %c0_3 = arith.constant 0 : index
    %c0_4 = arith.constant 0 : index
    %4 = vector.load %arg3[%c0_3, %c0_4] : memref<1x128xf32, #tpu.memory_space<vmem>>, vector<1x128xf32>
    %5 = vector.broadcast %4 : vector<1x128xf32> to vector<2x128xf32>
    %6 = arith.addf %3, %5 : vector<2x128xf32>
    %7 = arith.negf %6 : vector<2x128xf32>
    %8 = math.exp %7 : vector<2x128xf32>
    %cst_5 = arith.constant 1.000000e+00 : f32
    %9 = vector.broadcast %cst_5 : f32 to vector<2x128xf32>
    %10 = arith.addf %9, %8 : vector<2x128xf32>
    %11 = arith.divf %9, %10 : vector<2x128xf32>
    %c0_6 = arith.constant 0 : index
    %c0_7 = arith.constant 0 : index
    %12 = vector.load %arg4[%c0_6, %c0_7] : memref<2x128xf32, #tpu.memory_space<vmem>>, vector<2x128xf32>
    tpu.vector_store %arg4[%c0_6, %c0_7], %11 {strides = array<i32>} : memref<2x128xf32, #tpu.memory_space<vmem>>, vector<2x128xf32>,
    return
  }
  func.func @transform_0(%arg0: i32) -> (i32, i32) {
    %c0_i32 = arith.constant 0 : i32
    %c0_i32_0 = arith.constant 0 : i32
    return %arg0, %c0_i32 : i32, i32
  }
  func.func @transform_1(%arg0: i32) -> (i32, i32) {
    %c0_i32 = arith.constant 0 : i32
    %c0_i32_0 = arith.constant 0 : i32
    %c0_i32_1 = arith.constant 0 : i32
    return %c0_i32, %c0_i32_0 : i32, i32
  }
  func.func @transform_2(%arg0: i32) -> (i32, i32) {
    %c0_i32 = arith.constant 0 : i32
    %c0_i32_0 = arith.constant 0 : i32
    %c0_i32_1 = arith.constant 0 : i32
    return %c0_i32, %c0_i32_0 : i32, i32
  }
  func.func @transform_3(%arg0: i32) -> (i32, i32) {
    %c0_i32 = arith.constant 0 : i32
    %c0_i32_0 = arith.constant 0 : i32
    return %arg0, %c0_i32 : i32, i32
  }
}

</mosaic_0001>

<llo_original>
// kernel: classification_head_forward.1
$region0: #{classification_head_forward.1}
  #allocation0 [shape = 'u32[]', space=smem, size = 0x4, offset = 0x4, fixed_abs, tag = 'smem constant byte address 0x4 - core index']
  #allocation1 [shape = 'u32[144,128]{1,0:T(1,128)}', space=vmem, size = 0x12000, scoped, tag = 'internal scratch']
  %s0 = inlined_call_operand.vmem [shape: f32[2,32], index: 0, kind: input, shape index: {}]
  %s1 = inlined_call_operand.vmem [shape: bf16[32,128], index: 1, kind: input, shape index: {}]
  %s2 = inlined_call_operand.vmem [shape: f32[1,128], index: 2, kind: input, shape index: {}]
  %s3 = inlined_call_operand.hbm [shape: f32[2,128], index: 3, kind: output, shape index: {}]
  %s4 = sld [smem:[#allocation0]]
  $region22: #{classification_head_forward.1} parent=0
    _
  %s6 = ssub.s32 1, %s4
  %s7 = scalar_select 0, %s6, %s4
  $region1: #{classification_head_forward.1} parent=0
    #allocation2 [shape = 'u8[1024]{0}', space=vmem, size = 0x400, scoped, tag = 'output window, operand 0, single buffered']
    #allocation3 [shape = 's32[1]{0}', space=sflag, size = 0x4, scoped, tag = 'scoped memory for classification_head_forward.1']
    %8 = vsyncpa [#allocation3], 0
    // Predicated region
    $region2: #{classification_head_forward.1} parent=1 // pred_check
      _
    $region3: #{classification_head_forward.1} parent=1 // pred_check_branch
      %10 = sbr.rel (0) target = $region5
    $region4: #{classification_head_forward.1} parent=1 // pred_region
      _
    $region5: #{classification_head_forward.1} parent=1 // pred_fallthru
      _
    // Predicated region
    $region6: #{classification_head_forward.1} parent=1 // pred_check
      _
    $region7: #{classification_head_forward.1} parent=1 // pred_check_branch
      %12 = sbr.rel (0) target = $region9
    $region8: #{classification_head_forward.1} parent=1 // pred_region
      _
    $region9: #{classification_head_forward.1} parent=1 // pred_fallthru
      _
    // Predicated region
    $region10: #{classification_head_forward.1} parent=1 // pred_check
      _
    $region11: #{classification_head_forward.1} parent=1 // pred_check_branch
      %14 = sbr.rel (0) target = $region13
    $region12: #{classification_head_forward.1} parent=1 // pred_region
      _
    $region13: #{classification_head_forward.1} parent=1 // pred_fallthru
      _
    %v16 = vld [vmem:[%s0] sm:$0x3]
    %v17 = vpack.c.bf16 %v16, %v16
    %v18 = vld [vmem:[%s1] sm:$0xf]
    %v19 = vld [vmem:[%s1 + $0x4] sm:$0xf]
    %v20 = vld [vmem:[%s1 + $0x8] sm:$0xf]
    %v21 = vld [vmem:[%s1 + $0xc] sm:$0xf]
    %v22 = vld [vmem:[%s2] sm:$0x1]
    %v24 = vlaneseq
    %v25 = vshrl.u32 %v24, 7
    %v26 = vsub.s32 0, %v25
    %v27 = vrot.slane %v22, %v26
    %v33 = vunpack.c.l.b16 %v18
    %v34 = vunpack.c.l.b16 %v19
    %v35 = vunpack.c.l.b16 %v20
    %v36 = vunpack.c.l.b16 %v21
    %v37 = vpack.c.b16 %v34, %v33
    %v38 = vpack.c.b16 %v36, %v35
    %vm41 = vcmask 261120
    %v43 = vsel %vm41, %v17, 0
    %45 = vmatprep.subr.bf16.mxu0 0
    %46 = vmatpush1.bf16.msra.mxu0 %v37
    %47 = vmatprep.subr.bf16.mxu0 0
    %48 = vmatpush1.bf16.msra.mxu0 %v38
    %49 = vmatprep.subr.bf16.mxu0 0
    %50 = vmatpush1.bf16.msra.mxu0 0
    %51 = vmatprep.subr.bf16.mxu0 0
    %52 = vmatpush1.bf16.msra.mxu0 0
    %53 = vmatprep.subr.bf16.mxu0 0
    %54 = vmatpush1.bf16.msra.mxu0 0
    %55 = vmatprep.subr.bf16.mxu0 0
    %56 = vmatpush1.bf16.msra.mxu0 0
    %57 = vmatprep.subr.bf16.mxu0 0
    %58 = vmatpush1.bf16.msra.mxu0 0
    %59 = vmatprep.subr.bf16.mxu0 0
    %60 = vmatpush1.bf16.msra.mxu0 0
    %61 = vmatprep.subr.bf16.mxu0 0
    %62 = vmatpush1.bf16.msra.mxu0 0
    %63 = vmatprep.subr.bf16.mxu0 0
    %64 = vmatpush1.bf16.msra.mxu0 0
    %65 = vmatprep.subr.bf16.mxu0 0
    %66 = vmatpush1.bf16.msra.mxu0 0
    %67 = vmatprep.subr.bf16.mxu0 0
    %68 = vmatpush1.bf16.msra.mxu0 0
    %69 = vmatprep.subr.bf16.mxu0 0
    %70 = vmatpush1.bf16.msra.mxu0 0
    %71 = vmatprep.subr.bf16.mxu0 0
    %72 = vmatpush1.bf16.msra.mxu0 0
    %73 = vmatprep.subr.bf16.mxu0 0
    %74 = vmatpush1.bf16.msra.mxu0 0
    %75 = vmatprep.subr.bf16.mxu0 0
    %76 = vmatpush1.bf16.msra.mxu0 0
    %77 = vmatprep.mubr.bf16.mxu0 0
    %78 = vmatmul.mubr.bf16.gmra.mrb[0].mxu0 %v43
    %v79 = vpop.f32.mrb[0].mxu0
    %v80 = vadd.f32 %v27, %v79
    %v81 = vpop.f32.mrb[0].mxu0
    %v82 = vpop.f32.mrb[0].mxu0
    %v83 = vpop.f32.mrb[0].mxu0
    %84 = vdwg.mxu0
    %v85 = vxor.u32 %v80, 2147483648
    %v86 = vmul.f32 %v85, 1.442695
    %v87 = vpow.pop %v86
    %v88 = vadd.f32 %v87, 1.0
    %v89 = vrcp.pop %v88
    %v90 = vmul.f32 1.0, %v89
    %91 = vst [vmem:[#allocation2] sm:$0x3] %v90
    // Predicated region
    $region14: #{classification_head_forward.1} parent=1 // pred_check
      _
    $region15: #{classification_head_forward.1} parent=1 // pred_check_branch
      %93 = sbr.rel (0) target = $region17
    $region16: #{classification_head_forward.1} parent=1 // pred_region
      %s95 = ssub.s32 32, 32
      %96 = vsyncadd [#allocation3], %s95
      %s98 = sshll.u32 [#allocation2], 4
      %s99 = int_to_ptr.vmem [resolvable:$true] %s98
      %101 = dma.vmem_to_hbm [thread:$0]  %s99, 32, %s3, [#allocation3]
    $region17: #{classification_head_forward.1} parent=1 // pred_fallthru
      _
    // Predicated region
    $region18: #{classification_head_forward.1} parent=1 // pred_check
      _
    $region19: #{classification_head_forward.1} parent=1 // pred_check_branch
      %103 = sbr.rel (0) target = $region21
    $region20: #{classification_head_forward.1} parent=1 // pred_region
      %104 = dma.done [#allocation3], 32
    $region21: #{classification_head_forward.1} parent=1 // pred_fallthru
      _
    %105 = vsyncpa [#allocation3], 1

</llo_original>
